<compile_context>
chip_gen: v5e
topology: v5e:2x2
jax: 0.10.0
libtpu: 0.0.40
codegen_flags: <defaults>
</compile_context>

<pallas_src>
import functools

import jax
import jax.numpy as jnp
from jax import lax
from jax.experimental import pallas as pl
from jax.experimental.pallas import tpu as pltpu

EPS = 1e-12  # torch.nn.functional.normalize default eps


def sp_kernel(x_ref, w_ref, b_ref, cent_ref, o_ref, *, frames):
    # x_ref:   (Nb*T, C)  flattened frames for Nb batch elements
    # w_ref:   (K, C)     1x1 conv weight
    # b_ref:   (1, K)     conv bias
    # cent_ref:(K, C)     centroids
    # o_ref:   (Nb, 1, K*C) lane-dense output slab
    M, C = x_ref.shape
    K = w_ref.shape[0]
    nb = M // frames

    x = x_ref[...]                                                # (M, C)

    # F.normalize(grids, p=2, dim=channel): per-frame L2 norm over C.
    # rsqrt(max(ss, eps^2)) == 1 / max(sqrt(ss), eps); rsqrt runs on the EUP.
    ss = jnp.sum(x * x, axis=-1, keepdims=True)                   # (M, 1)
    x_n = x * lax.rsqrt(jnp.maximum(ss, EPS * EPS))               # (M, C)

    # 1x1 conv == one big MXU matmul over all Nb*T frames: (M, C) @ (C, K) + b
    logits = lax.dot_general(
        x_n, w_ref[...], (((1,), (1,)), ((), ())),
        preferred_element_type=jnp.float32) + b_ref[0]            # (M, K)

    # softmax over the K regions (exp on EUP; exact reciprocal keeps the
    # 1e-5 reference tolerance — switch to approx=True if tolerance allows).
    m = jnp.max(logits, axis=-1, keepdims=True)
    e = jnp.exp(logits - m)
    denom = jnp.sum(e, axis=-1, keepdims=True)
    a = e * pl.reciprocal(denom, approx=False)                    # (M, K)

    # Per-batch aggregation:
    #   vlad[b,k,c] = sum_t a[b,t,k] * x_n[b,t,c] - (sum_t a[b,t,k]) * cent[k,c]
    a3 = a.reshape(nb, frames, K)                                 # sublane split
    x3 = x_n.reshape(nb, frames, C)
    ax = jnp.einsum('btk,btc->bkc', a3, x3,
                    preferred_element_type=jnp.float32)           # (Nb, K, C)
    s = jnp.sum(a3, axis=1)                                       # (Nb, K)
    vlad = ax - s[:, :, None] * cent_ref[...][None, :, :]         # (Nb, K, C)

    # intra-normalization (per region, over C)
    rn = jnp.sum(vlad * vlad, axis=-1, keepdims=True)
    vlad = vlad * lax.rsqrt(jnp.maximum(rn, EPS * EPS))

    # global L2 normalization over the flattened (K*C) descriptor, stored as a
    # lane-dense (Nb, K*C) slab (K*C is a multiple of 128 for realistic dims).
    flat = vlad.reshape(nb, K * C)
    gn = jnp.sum(flat * flat, axis=-1, keepdims=True)
    o_ref[:, 0, :] = flat * lax.rsqrt(jnp.maximum(gn, EPS * EPS))


def _pick_batch_block(N, T, C, K, target_rows=256, vmem_budget=4 << 20):
    """Pick Nb (batch elements per grid step).

    Goals: grow the matmul M-dim toward `target_rows` (256 fills v6e/v7x MXU
    tiles, 128 fills v5e), keep >= 2 grid steps when N >= 2 so both v7x
    TensorCores / megacore get work, keep the double-buffered blocks well
    under the (v7x-sized) VMEM budget, and keep the flattened frame block
    sublane-aligned (Nb*T % 8 == 0) unless we take the whole array.
    """
    per_elem = 4 * (2 * T * C + 2 * K * C)  # double-buffered in/out f32 blocks
    cap = max(1, vmem_budget // per_elem)
    want = min(max(1, -(-target_rows // T)), cap)
    if N >= 2:
        want = min(want, N // 2)
    best = None
    for d in range(1, N + 1):
        if N % d:
            continue
        if d > want:
            break
        if (d * T) % 8 == 0 or d == N:
            best = d
    if best is None:
        for d in range(1, N + 1):
            if N % d == 0 and ((d * T) % 8 == 0 or d == N):
                best = d
                break
    return best


def sp_forward(grids, conv_w, conv_b, centroids, *, batch_block=None):
    """grids: (N, frame, C) f32; conv_w: (K, C); conv_b: (K,); centroids: (K, C)."""
    N, T, C = grids.shape
    K = centroids.shape[0]
    Nb = batch_block if batch_block is not None else _pick_batch_block(N, T, C, K)
    assert N % Nb == 0

    grids_flat = grids.reshape(N * T, C)      # free layout plumbing in the wrapper
    conv_b2 = conv_b.reshape(1, K)

    out = pl.pallas_call(
        functools.partial(sp_kernel, frames=T),
        out_shape=jax.ShapeDtypeStruct((N, 1, K * C), jnp.float32),
        grid_spec=pltpu.PrefetchScalarGridSpec(
            num_scalar_prefetch=0,
            grid=(N // Nb,),
            in_specs=[
                pl.BlockSpec((Nb * T, C), lambda n: (n, 0)),
                pl.BlockSpec((K, C), lambda n: (0, 0)),
                pl.BlockSpec((1, K), lambda n: (0, 0)),
                pl.BlockSpec((K, C), lambda n: (0, 0)),
            ],
            out_specs=pl.BlockSpec((Nb, 1, K * C), lambda n: (n, 0, 0)),
        ),
        compiler_params=pltpu.CompilerParams(
            dimension_semantics=("parallel",),
            vmem_limit_bytes=32 * 1024 * 1024),
    )(grids_flat, conv_w, conv_b2, centroids)

    # TODO(synk): for very large T, add an inner "arbitrary" grid axis over
    # frame tiles with a (K, C) accumulator (pl.when init/finalize); at these
    # shapes a single frame block per step is optimal.
    return out.reshape(N, K, C)


def sp_reference(grids, conv_w, conv_b, centroids):
    """Plain-JAX reference mirroring the PyTorch forward (for verification)."""
    N, T, C = grids.shape
    K = centroids.shape[0]
    x = jnp.transpose(grids, (0, 2, 1))                           # (N, C, T)
    x = x / jnp.maximum(jnp.linalg.norm(x, axis=1, keepdims=True), EPS)
    logits = jnp.einsum('kc,nct->nkt', conv_w, x) + conv_b[None, :, None]
    a = jax.nn.softmax(logits, axis=1)                            # (N, K, T)
    residual = x[:, None, :, :] - centroids[None, :, :, None]     # (N, K, C, T)
    residual = residual * a[:, :, None, :]
    p = residual.sum(axis=-1)                                     # (N, K, C)
    p = p / jnp.maximum(jnp.linalg.norm(p, axis=2, keepdims=True), EPS)
    p = p.reshape(N, -1)
    p = p / jnp.maximum(jnp.linalg.norm(p, axis=1, keepdims=True), EPS)
    return p.reshape(N, K, C)


if __name__ == "__main__":
    # Small shapes consistent with the module: batch N=8, frame=8, dim C=32,
    # num_regions K=16 (N=8 so the batched grid step Nb=4 is exercised).
    N, T, C, K = 8, 8, 32, 16

    key = jax.random.PRNGKey(0)
    k_x, k_w, k_b, k_c = jax.random.split(key, 4)

    grids = jax.random.normal(k_x, (N, T, C), dtype=jnp.float32)

    # Deterministic parameter init (shapes from nn.Conv2d(dim, K, 1) + centroids).
    # Xavier-uniform for >1-dim params (as in init_weights), small uniform bias.
    xav_w = (6.0 / (C + K)) ** 0.5
    conv_w = jax.random.uniform(k_w, (K, C), jnp.float32, -xav_w, xav_w)
    conv_b = jax.random.uniform(k_b, (K,), jnp.float32,
                                -1.0 / C ** 0.5, 1.0 / C ** 0.5)
    xav_c = (6.0 / (K + C)) ** 0.5
    centroids = jax.random.uniform(k_c, (K, C), jnp.float32, -xav_c, xav_c)

    out = sp_forward(grids, conv_w, conv_b, centroids)
    out = jax.block_until_ready(out)

    ref = sp_reference(grids, conv_w, conv_b, centroids)
    assert out.shape == (N, K, C)
    assert jnp.allclose(out, ref, atol=1e-5, rtol=1e-5), (
        float(jnp.max(jnp.abs(out - ref))))

    print("KERNEL_OK")
</pallas_src>

<mosaic_0001>
module attributes {stable_mosaic.version = 11 : i64} {
  func.func @sp_kernel(%arg0: i32, %arg1: memref<32x32xf32, #tpu.memory_space<vmem>>, %arg2: memref<16x32xf32, #tpu.memory_space<vmem>>, %arg3: memref<1x16xf32, #tpu.memory_space<vmem>>, %arg4: memref<16x32xf32, #tpu.memory_space<vmem>>, %arg5: memref<4x1x512xf32, #tpu.memory_space<vmem>>) attributes {dimension_semantics = [#tpu.dimension_semantics<parallel>], iteration_bounds = array<i64: 2>, scalar_prefetch = 0 : i64, scratch_operands = 0 : i64, tpu.core_type = #tpu.core_type<tc>, window_params = [{transform_indices = @transform_0, window_bounds = array<i64: 32, 32>}, {pipeline_mode = #tpu.pipeline_mode<synchronous>, transform_indices = @transform_1, window_bounds = array<i64: 16, 32>}, {pipeline_mode = #tpu.pipeline_mode<synchronous>, transform_indices = @transform_2, window_bounds = array<i64: 1, 16>}, {pipeline_mode = #tpu.pipeline_mode<synchronous>, transform_indices = @transform_3, window_bounds = array<i64: 16, 32>}, {transform_indices = @transform_4, window_bounds = array<i64: 4, 1, 512>}]} {
    %c0 = arith.constant 0 : index
    %c0_0 = arith.constant 0 : index
    %0 = vector.load %arg1[%c0, %c0_0] : memref<32x32xf32, #tpu.memory_space<vmem>>, vector<32x32xf32>
    %1 = arith.mulf %0, %0 : vector<32x32xf32>
    %cst = arith.constant dense<0.000000e+00> : vector<32xf32>
    %2 = vector.multi_reduction <add>, %1, %cst [1] : vector<32x32xf32> to vector<32xf32>
    %3 = vector.shape_cast %2 : vector<32xf32> to vector<32x1xf32>
    %cst_1 = arith.constant 1.000000e-24 : f32
    %4 = vector.broadcast %cst_1 : f32 to vector<32x1xf32>
    %5 = arith.maximumf %3, %4 : vector<32x1xf32>
    %6 = math.rsqrt %5 : vector<32x1xf32>
    %7 = vector.broadcast %6 : vector<32x1xf32> to vector<32x32xf32>
    %8 = arith.mulf %0, %7 : vector<32x32xf32>
    %c0_2 = arith.constant 0 : index
    %c0_3 = arith.constant 0 : index
    %9 = vector.load %arg2[%c0_2, %c0_3] : memref<16x32xf32, #tpu.memory_space<vmem>>, vector<16x32xf32>
    %cst_4 = arith.constant dense<0.000000e+00> : vector<32x16xf32>
    %10 = tpu.matmul %8, %9, %cst_4 {dimension_numbers = #tpu.dot_dimension_numbers<[1], [1], [0], [0], [0, 0, 1, 0], [], []>} : vector<32x32xf32>, vector<16x32xf32>, vector<32x16xf32> -> vector<32x16xf32>
    %c0_5 = arith.constant 0 : index
    %c0_6 = arith.constant 0 : index
    %11 = vector.load %arg3[%c0_5, %c0_6] : memref<1x16xf32, #tpu.memory_space<vmem>>, vector<1x16xf32>
    %12 = vector.shape_cast %11 : vector<1x16xf32> to vector<16xf32>
    %13 = vector.shape_cast %12 : vector<16xf32> to vector<1x16xf32>
    %14 = vector.broadcast %13 : vector<1x16xf32> to vector<32x16xf32>
    %15 = arith.addf %10, %14 : vector<32x16xf32>
    %cst_7 = arith.constant dense<0xFF800000> : vector<32xf32>
    %16 = vector.multi_reduction <maximumf>, %15, %cst_7 [1] : vector<32x16xf32> to vector<32xf32>
    %17 = vector.shape_cast %16 : vector<32xf32> to vector<32x1xf32>
    %18 = vector.broadcast %17 : vector<32x1xf32> to vector<32x16xf32>
    %19 = arith.subf %15, %18 : vector<32x16xf32>
    %20 = math.exp %19 : vector<32x16xf32>
    %cst_8 = arith.constant dense<0.000000e+00> : vector<32xf32>
    %21 = vector.multi_reduction <add>, %20, %cst_8 [1] : vector<32x16xf32> to vector<32xf32>
    %22 = vector.shape_cast %21 : vector<32xf32> to vector<32x1xf32>
    %23 = tpu.reciprocal %22 : vector<32x1xf32> -> vector<32x1xf32>
    %24 = vector.broadcast %23 : vector<32x1xf32> to vector<32x16xf32>
    %25 = arith.mulf %20, %24 : vector<32x16xf32>
    %26 = vector.shape_cast %25 : vector<32x16xf32> to vector<4x8x16xf32>
    %27 = vector.shape_cast %8 : vector<32x32xf32> to vector<4x8x32xf32>
    "tpu.trace_start"() <{level = 10 : i32, message = "btk,btc->bkc"}> : () -> ()
    %cst_9 = arith.constant dense<0.000000e+00> : vector<4x16x32xf32>
    %28 = tpu.matmul %26, %27, %cst_9 {dimension_numbers = #tpu.dot_dimension_numbers<[1], [1], [2], [2], [0, 0, 0, 2, 1, 2], [0], [0]>} : vector<4x8x16xf32>, vector<4x8x32xf32>, vector<4x16x32xf32> -> vector<4x16x32xf32>
    "tpu.trace_stop"() : () -> ()
    %cst_10 = arith.constant dense<0.000000e+00> : vector<4x16xf32>
    %29 = vector.multi_reduction <add>, %26, %cst_10 [1] : vector<4x8x16xf32> to vector<4x16xf32>
    %30 = vector.shape_cast %29 : vector<4x16xf32> to vector<4x16x1xf32>
    %c0_11 = arith.constant 0 : index
    %c0_12 = arith.constant 0 : index
    %31 = vector.load %arg4[%c0_11, %c0_12] : memref<16x32xf32, #tpu.memory_space<vmem>>, vector<16x32xf32>
    %32 = vector.shape_cast %31 : vector<16x32xf32> to vector<1x16x32xf32>
    %33 = vector.broadcast %30 : vector<4x16x1xf32> to vector<4x16x32xf32>
    %34 = vector.broadcast %32 : vector<1x16x32xf32> to vector<4x16x32xf32>
    %35 = arith.mulf %33, %34 : vector<4x16x32xf32>
    %36 = arith.subf %28, %35 : vector<4x16x32xf32>
    %37 = arith.mulf %36, %36 : vector<4x16x32xf32>
    %cst_13 = arith.constant dense<0.000000e+00> : vector<4x16xf32>
    %38 = vector.multi_reduction <add>, %37, %cst_13 [2] : vector<4x16x32xf32> to vector<4x16xf32>
    %39 = vector.shape_cast %38 : vector<4x16xf32> to vector<4x16x1xf32>
    %cst_14 = arith.constant 1.000000e-24 : f32
    %40 = vector.broadcast %cst_14 : f32 to vector<4x16x1xf32>
    %41 = arith.maximumf %39, %40 : vector<4x16x1xf32>
    %42 = math.rsqrt %41 : vector<4x16x1xf32>
    %43 = vector.broadcast %42 : vector<4x16x1xf32> to vector<4x16x32xf32>
    %44 = arith.mulf %36, %43 : vector<4x16x32xf32>
    %45 = vector.shape_cast %44 : vector<4x16x32xf32> to vector<4x512xf32>
    %46 = arith.mulf %45, %45 : vector<4x512xf32>
    %cst_15 = arith.constant dense<0.000000e+00> : vector<4xf32>
    %47 = vector.multi_reduction <add>, %46, %cst_15 [1] : vector<4x512xf32> to vector<4xf32>
    %48 = vector.shape_cast %47 : vector<4xf32> to vector<4x1xf32>
    %cst_16 = arith.constant 1.000000e-24 : f32
    %49 = vector.broadcast %cst_16 : f32 to vector<4x1xf32>
    %50 = arith.maximumf %48, %49 : vector<4x1xf32>
    %51 = math.rsqrt %50 : vector<4x1xf32>
    %52 = vector.broadcast %51 : vector<4x1xf32> to vector<4x512xf32>
    %53 = arith.mulf %45, %52 : vector<4x512xf32>
    %c0_17 = arith.constant 0 : index
    %c0_18 = arith.constant 0 : index
    %c0_19 = arith.constant 0 : index
    %54 = vector.load %arg5[%c0_17, %c0_18, %c0_19] : memref<4x1x512xf32, #tpu.memory_space<vmem>>, vector<4x1x512xf32>
    %55 = vector.shape_cast %54 : vector<4x1x512xf32> to vector<4x512xf32>
    %56 = vector.shape_cast %53 : vector<4x512xf32> to vector<4x1x512xf32>
    tpu.vector_store %arg5[%c0_17, %c0_18, %c0_19], %56 {strides = array<i32>} : memref<4x1x512xf32, #tpu.memory_space<vmem>>, vector<4x1x512xf32>,
    return
  }
  func.func @transform_0(%arg0: i32) -> (i32, i32) {
    %c0_i32 = arith.constant 0 : i32
    %c0_i32_0 = arith.constant 0 : i32
    return %arg0, %c0_i32 : i32, i32
  }
  func.func @transform_1(%arg0: i32) -> (i32, i32) {
    %c0_i32 = arith.constant 0 : i32
    %c0_i32_0 = arith.constant 0 : i32
    %c0_i32_1 = arith.constant 0 : i32
    return %c0_i32, %c0_i32_0 : i32, i32
  }
  func.func @transform_2(%arg0: i32) -> (i32, i32) {
    %c0_i32 = arith.constant 0 : i32
    %c0_i32_0 = arith.constant 0 : i32
    %c0_i32_1 = arith.constant 0 : i32
    return %c0_i32, %c0_i32_0 : i32, i32
  }
  func.func @transform_3(%arg0: i32) -> (i32, i32) {
    %c0_i32 = arith.constant 0 : i32
    %c0_i32_0 = arith.constant 0 : i32
    %c0_i32_1 = arith.constant 0 : i32
    return %c0_i32, %c0_i32_0 : i32, i32
  }
  func.func @transform_4(%arg0: i32) -> (i32, i32, i32) {
    %c0_i32 = arith.constant 0 : i32
    %c0_i32_0 = arith.constant 0 : i32
    %c0_i32_1 = arith.constant 0 : i32
    return %arg0, %c0_i32, %c0_i32_0 : i32, i32, i32
  }
}

</mosaic_0001>

<llo_original>
// kernel: tpu_custom_call.1
$region0: #{tpu_custom_call.1}
  #allocation0 [shape = 'u32[]', space=smem, size = 0x4, offset = 0x4, fixed_abs, tag = 'smem constant byte address 0x4 - core index']
  #allocation1 [shape = 'u32[72,128]{1,0:T(1,128)}', space=vmem, size = 0x9000, scoped, tag = 'internal scratch']
  %s0 = inlined_call_operand.vmem [shape: f32[64,32], index: 0, kind: input, shape index: {}]
  %s1 = inlined_call_operand.vmem [shape: f32[16,32], index: 1, kind: input, shape index: {}]
  %s2 = inlined_call_operand.vmem [shape: f32[1,16], index: 2, kind: input, shape index: {}]
  %s3 = inlined_call_operand.vmem [shape: f32[16,32], index: 3, kind: input, shape index: {}]
  %s4 = inlined_call_operand.hbm [shape: f32[8,1,512], index: 4, kind: output, shape index: {}]
  %s5 = sld [smem:[#allocation0]]
  $region49: #{tpu_custom_call.1} parent=0
    _
  %s7 = ssub.s32 1, %s5
  %s8 = scalar_select 0, %s7, %s5
  $region1: #{tpu_custom_call.1} parent=0
    #allocation2 [shape = 'u8[16384]{0}', space=vmem, size = 0x4000, scoped, tag = 'output window, operand 0']
    #allocation3 [shape = 's32[2]{0}', space=sflag, size = 0x8, scoped, tag = 'scoped memory for tpu_custom_call.1']
    %9 = vsyncpa [#allocation3], 0
    %s10 = scalar_lea.sflag [#allocation3], 1
    %11 = vsyncpa %s10, 0
    loop: start=0, step=1, limit=4
    $region2: #{tpu_custom_call.1} parent=1 // loop_pre_header
      _
    $region3: #{tpu_custom_call.1} parent=1 // loop_header
      %s13 = sphi 0, %s17
      %p14 = scmp.ge.s32.totalorder %s13, 4
      %s23 = sphi 0, %s25
      %s26 = sphi 0, %s23
      %s27 = sphi 0, %s26
      %s43 = sphi 0, %s27
      %s47 = sphi 0, %s47
      %s49 = sphi 0, %s47
      %s50 = sphi 0, %s49
      %s64 = sphi 0, %s50
      %s68 = sphi 0, %s68
      %s70 = sphi 0, %s68
      %s71 = sphi 0, %s70
      %s85 = sphi 0, %s71
      %s89 = sphi 0, %s89
      %s91 = sphi 0, %s89
      %s92 = sphi 0, %s91
      %s106 = sphi 0, %s92
      %s112 = sphi 0, %s114
      %s115 = sphi 0, %s112
      %s116 = sphi 0, %s115
      %s132 = sphi 0, %s116
    $region4: #{tpu_custom_call.1} parent=1 // loop_header_branch
      %16 = sbr.rel (%p14) target = $region8
    $region5: #{tpu_custom_call.1} parent=1 // loop_body
      %s18 = ssub.s32 %s13, 1
      %s19 = ssub.s32 %s13, 2
      %s20 = sadd.s32 %s13, 1
      %s21 = ssub.s32 %s13, %s20
      %p22 = scmp.eq.s32.totalorder %s21, 0
      %s24 = sadd.s32 %s23, 1
      %s25 = scalar_select %p22, %s23, %s24
      %p28 = pneg %p22
      %p29 = scmp.eq.s32.totalorder %s13, 1
      %p30 = por %p28, %p29
      %p31 = scmp.ne.s32.totalorder %s23, %s26
      %p32 = scmp.eq.s32.totalorder %s13, 0
      %p33 = por %p31, %p32
      %p34 = scmp.ne.s32.totalorder %s23, %s26
      %p35 = scmp.eq.s32.totalorder %s18, 1
      %p36 = por %p34, %p35
      %p37 = scmp.ne.s32.totalorder %s26, %s27
      %p38 = scmp.eq.s32.totalorder %s18, 0
      %p39 = por %p37, %p38
      %p40 = scmp.ne.s32.totalorder %s26, %s27
      %p41 = scmp.eq.s32.totalorder %s19, 1
      %p42 = por %p40, %p41
      %p44 = scmp.ne.s32.totalorder %s27, %s43
      %p45 = scmp.eq.s32.totalorder %s19, 0
      %p46 = por %p44, %p45
      %s48 = sadd.s32 %s47, 1
      %p51 = scmp.eq.s32.totalorder %s13, 1
      %p52 = scmp.ne.s32.totalorder %s47, %s49
      %p53 = scmp.eq.s32.totalorder %s13, 0
      %p54 = por %p52, %p53
      %p55 = scmp.ne.s32.totalorder %s47, %s49
      %p56 = scmp.eq.s32.totalorder %s18, 1
      %p57 = por %p55, %p56
      %p58 = scmp.ne.s32.totalorder %s49, %s50
      %p59 = scmp.eq.s32.totalorder %s18, 0
      %p60 = por %p58, %p59
      %p61 = scmp.ne.s32.totalorder %s49, %s50
      %p62 = scmp.eq.s32.totalorder %s19, 1
      %p63 = por %p61, %p62
      %p65 = scmp.ne.s32.totalorder %s50, %s64
      %p66 = scmp.eq.s32.totalorder %s19, 0
      %p67 = por %p65, %p66
      %s69 = sadd.s32 %s68, 1
      %p72 = scmp.eq.s32.totalorder %s13, 1
      %p73 = scmp.ne.s32.totalorder %s68, %s70
      %p74 = scmp.eq.s32.totalorder %s13, 0
      %p75 = por %p73, %p74
      %p76 = scmp.ne.s32.totalorder %s68, %s70
      %p77 = scmp.eq.s32.totalorder %s18, 1
      %p78 = por %p76, %p77
      %p79 = scmp.ne.s32.totalorder %s70, %s71
      %p80 = scmp.eq.s32.totalorder %s18, 0
      %p81 = por %p79, %p80
      %p82 = scmp.ne.s32.totalorder %s70, %s71
      %p83 = scmp.eq.s32.totalorder %s19, 1
      %p84 = por %p82, %p83
      %p86 = scmp.ne.s32.totalorder %s71, %s85
      %p87 = scmp.eq.s32.totalorder %s19, 0
      %p88 = por %p86, %p87
      %s90 = sadd.s32 %s89, 1
      %p93 = scmp.eq.s32.totalorder %s13, 1
      %p94 = scmp.ne.s32.totalorder %s89, %s91
      %p95 = scmp.eq.s32.totalorder %s13, 0
      %p96 = por %p94, %p95
      %p97 = scmp.ne.s32.totalorder %s89, %s91
      %p98 = scmp.eq.s32.totalorder %s18, 1
      %p99 = por %p97, %p98
      %p100 = scmp.ne.s32.totalorder %s91, %s92
      %p101 = scmp.eq.s32.totalorder %s18, 0
      %p102 = por %p100, %p101
      %p103 = scmp.ne.s32.totalorder %s91, %s92
      %p104 = scmp.eq.s32.totalorder %s19, 1
      %p105 = por %p103, %p104
      %p107 = scmp.ne.s32.totalorder %s92, %s106
      %p108 = scmp.eq.s32.totalorder %s19, 0
      %p109 = por %p107, %p108
      %s110 = ssub.s32 %s13, %s20
      %p111 = scmp.eq.s32.totalorder %s110, 0
      %s113 = sadd.s32 %s112, 1
      %s114 = scalar_select %p111, %s112, %s113
      %p117 = pneg %p111
      %p118 = scmp.eq.s32.totalorder %s13, 1
      %p119 = por %p117, %p118
      %p120 = scmp.ne.s32.totalorder %s112, %s115
      %p121 = scmp.eq.s32.totalorder %s13, 0
      %p122 = por %p120, %p121
      %p123 = scmp.ne.s32.totalorder %s112, %s115
      %p124 = scmp.eq.s32.totalorder %s18, 1
      %p125 = por %p123, %p124
      %p126 = scmp.ne.s32.totalorder %s115, %s116
      %p127 = scmp.eq.s32.totalorder %s18, 0
      %p128 = por %p126, %p127
      %p129 = scmp.ne.s32.totalorder %s115, %s116
      %p130 = scmp.eq.s32.totalorder %s19, 1
      %p131 = por %p129, %p130
      %p133 = scmp.ne.s32.totalorder %s116, %s132
      %p134 = scmp.eq.s32.totalorder %s19, 0
      %p135 = por %p133, %p134
      %p136 = scmp.le.s32.totalorder 1, %s13
      %p137 = scmp.lt.s32.totalorder %s13, 3
      %p138 = pnand %p136, %p137
      %p139 = pneg %p138
      // Predicated region
      $region9: #{tpu_custom_call.1} parent=5 // pred_check
        _
      $region10: #{tpu_custom_call.1} parent=5 // pred_check_branch
        %141 = sbr.rel (%p138) target = $region12
      $region11: #{tpu_custom_call.1} parent=5 // pred_region
        %s142 = ssub.s32 %s13, 1
        // Predicated region
        $region13: #{tpu_custom_call.1} parent=11 // pred_check
          %p143 = pneg %p60
        $region14: #{tpu_custom_call.1} parent=11 // pred_check_branch
          %145 = sbr.rel (%p143) target = $region16
        $region15: #{tpu_custom_call.1} parent=11 // pred_region
          _
        $region16: #{tpu_custom_call.1} parent=11 // pred_fallthru
          _
        // Predicated region
        $region17: #{tpu_custom_call.1} parent=11 // pred_check
          %p146 = pneg %p81
        $region18: #{tpu_custom_call.1} parent=11 // pred_check_branch
          %148 = sbr.rel (%p146) target = $region20
        $region19: #{tpu_custom_call.1} parent=11 // pred_region
          _
        $region20: #{tpu_custom_call.1} parent=11 // pred_fallthru
          _
        // Predicated region
        $region21: #{tpu_custom_call.1} parent=11 // pred_check
          %p149 = pneg %p102
        $region22: #{tpu_custom_call.1} parent=11 // pred_check_branch
          %151 = sbr.rel (%p149) target = $region24
        $region23: #{tpu_custom_call.1} parent=11 // pred_region
          _
        $region24: #{tpu_custom_call.1} parent=11 // pred_fallthru
          _
      $region12: #{tpu_custom_call.1} parent=5 // pred_fallthru
        _
      %p152 = scmp.lt.s32.totalorder %s13, 2
      // Predicated region
      $region25: #{tpu_custom_call.1} parent=5 // pred_check
        %p153 = pneg %p152
      $region26: #{tpu_custom_call.1} parent=5 // pred_check_branch
        %155 = sbr.rel (%p153) target = $region28
      $region27: #{tpu_custom_call.1} parent=5 // pred_region
        // Predicated region
        $region29: #{tpu_custom_call.1} parent=27 // pred_check
          %p156 = pneg %p33
        $region30: #{tpu_custom_call.1} parent=27 // pred_check_branch
          %158 = sbr.rel (%p156) target = $region32
        $region31: #{tpu_custom_call.1} parent=27 // pred_region
          %s159 = smul.u32 4, %s13
          %p160 = scmp.lt.s32.totalorder %s159, 7
          %s161 = scalar_select %p160, %s159, 7
          %s162 = smul.addr %s161, 8
          %s163 = scalar_lea.vmem %s0, %s162
          %s164 = smul.u32 4, %s13
        $region32: #{tpu_custom_call.1} parent=27 // pred_fallthru
          _
      $region28: #{tpu_custom_call.1} parent=5 // pred_fallthru
        _
      %p165 = scmp.le.s32.totalorder 1, %s13
      %p166 = scmp.lt.s32.totalorder %s13, 3
      %p167 = pnand %p165, %p166
      %p168 = pneg %p167
      // Predicated region
      $region33: #{tpu_custom_call.1} parent=5 // pred_check
        _
      $region34: #{tpu_custom_call.1} parent=5 // pred_check_branch
        %170 = sbr.rel (%p167) target = $region36
      $region35: #{tpu_custom_call.1} parent=5 // pred_region
        %s171 = ssub.s32 %s13, 1
        %s172 = smul.u32 4, %s18
        %p173 = scmp.lt.s32.totalorder %s172, 7
        %s174 = scalar_select %p173, %s172, 7
        %s175 = smul.addr %s174, 8
        %s176 = scalar_lea.vmem %s0, %s175
        %p177 = pneg %p39
        %p178 = pneg %p36
        %p179 = pneg %p60
        %p180 = pneg %p57
        %p181 = pneg %p81
        %p182 = pneg %p78
        %p183 = pneg %p102
        %p184 = pneg %p99
        %p185 = pneg %p128
        %p186 = pneg %p125
        %s187 = sand.u32 %s115, 1
        %s188 = scalar_lea.sflag [#allocation3], %s187
        %s189 = sand.u32 %s115, 1
        %s190 = smul.addr %s189, 16
        %s191 = scalar_lea.vmem [#allocation2], %s190
        %s192 = smul.u32 4, %s18
        %p193 = scmp.lt.s32.totalorder %s192, 7
        %s194 = scalar_select %p193, %s192, 7
        %s195 = smul.addr %s194, 8
        %s196 = scalar_lea.vmem %s0, %s195
        %s197 = smul.u32 4, %s18
        %s198 = smul.u32 4, %s18
        %v199 = vld [vmem:[%s196] sm:$0xff]
        %v200 = vld [vmem:[%s196 + $0x8] sm:$0xff]
        %v201 = vld [vmem:[%s196 + $0x10] sm:$0xff]
        %v202 = vld [vmem:[%s196 + $0x18] sm:$0xff]
        %v203 = vmul.f32 %v199, %v199
        %v204 = vmul.f32 %v200, %v200
        %v205 = vmul.f32 %v201, %v201
        %v206 = vmul.f32 %v202, %v202
        %vm207 = vcmask 261120
        %v208 = vsel %vm207, %v203, 0.0
        %209 = vadd.xlane.f32.xlu0 %v208
        %v210 = vpop.xlane.xlu0 %209
        %v211 = vsel %vm207, %v204, 0.0
        %212 = vadd.xlane.f32.xlu0 %v211
        %v213 = vpop.xlane.xlu0 %212
        %v214 = vsel %vm207, %v205, 0.0
        %215 = vadd.xlane.f32.xlu0 %v214
        %v216 = vpop.xlane.xlu0 %215
        %v217 = vsel %vm207, %v206, 0.0
        %218 = vadd.xlane.f32.xlu0 %v217
        %v219 = vpop.xlane.xlu0 %218
        %v220 = vmax.f32 %v210, 1e-24
        %v221 = vmax.f32 %v213, 1e-24
        %v222 = vmax.f32 %v216, 1e-24
        %v223 = vmax.f32 %v219, 1e-24
        %v224 = vrsqrt.pop %v220
        %v225 = vmul.f32 %v224, %v220
        %v226 = vmul.f32 %v225, %v224
        %v227 = vmul.f32 0.5, %v226
        %v228 = vsub.f32 1.5, %v227
        %v229 = vmul.f32 %v224, %v228
        %vm230 = vweird.f32 %v220
        %vm231 = vweird.f32 %v224
        %vm232 = vmor %vm230, %vm231
        %v233 = vsel %vm232, %v224, %v229
        %v234 = vrsqrt.pop %v221
        %v235 = vmul.f32 %v234, %v221
        %v236 = vmul.f32 %v235, %v234
        %v237 = vmul.f32 0.5, %v236
        %v238 = vsub.f32 1.5, %v237
        %v239 = vmul.f32 %v234, %v238
        %vm240 = vweird.f32 %v221
        %vm241 = vweird.f32 %v234
        %vm242 = vmor %vm240, %vm241
        %v243 = vsel %vm242, %v234, %v239
        %v244 = vrsqrt.pop %v222
        %v245 = vmul.f32 %v244, %v222
        %v246 = vmul.f32 %v245, %v244
        %v247 = vmul.f32 0.5, %v246
        %v248 = vsub.f32 1.5, %v247
        %v249 = vmul.f32 %v244, %v248
        %vm250 = vweird.f32 %v222
        %vm251 = vweird.f32 %v244
        %vm252 = vmor %vm250, %vm251
        %v253 = vsel %vm252, %v244, %v249
        %v254 = vrsqrt.pop %v223
        %v255 = vmul.f32 %v254, %v223
        %v256 = vmul.f32 %v255, %v254
        %v257 = vmul.f32 0.5, %v256
        %v258 = vsub.f32 1.5, %v257
        %v259 = vmul.f32 %v254, %v258
        %vm260 = vweird.f32 %v223
        %vm261 = vweird.f32 %v254
        %vm262 = vmor %vm260, %vm261
        %v263 = vsel %vm262, %v254, %v259
        %v264 = vmul.f32 %v199, %v233
        %v265 = vmul.f32 %v200, %v243
        %v266 = vmul.f32 %v201, %v253
        %v267 = vmul.f32 %v202, %v263
        %v268 = vld [vmem:[%s1] sm:$0xff]
        %v269 = vld [vmem:[%s1 + $0x8] sm:$0xff]
        %v270 = vld [vmem:[%s2] sm:$0x1]
        %v272 = vperm.slane %v270, 0
        %v275 = vsel %vm207, %v264, 0
        %v278 = vsel %vm207, %v265, 0
        %v281 = vsel %vm207, %v266, 0
        %v284 = vsel %vm207, %v267, 0
        %v287 = vsel %vm207, %v268, 0
        %v290 = vsel %vm207, %v269, 0
        %292 = vmatpush.xpose.msra.mxu0 0.0
        %293 = vmatpush.xpose.msra.mxu0 0.0
        %294 = vmatpush.xpose.msra.mxu0 0.0
        %295 = vmatpush.xpose.msra.mxu0 0.0
        %296 = vmatpush.xpose.msra.mxu0 0.0
        %297 = vmatpush.xpose.msra.mxu0 0.0
        %298 = vmatpush.xpose.msra.mxu0 0.0
        %299 = vmatpush.xpose.msra.mxu0 0.0
        %300 = vmatpush.xpose.msra.mxu0 0.0
        %301 = vmatpush.xpose.msra.mxu0 0.0
        %302 = vmatpush.xpose.msra.mxu0 0.0
        %303 = vmatpush.xpose.msra.mxu0 0.0
        %304 = vmatpush.xpose.msra.mxu0 0.0
        %305 = vmatpush.xpose.msra.mxu0 0.0
        %306 = vmatpush.xpose.msra.mxu0 %v290
        %307 = vmatpush.xpose.msra.mxu0 %v287
        %308 = vmatmul.f32.gmra.mxu0 %v275
        %v309 = vpop.f32.mrf.mxu0
        %v310 = vadd.f32 %v272, %v309
        %311 = vmatmul.f32.gmra.mxu0 %v278
        %v312 = vpop.f32.mrf.mxu0
        %v313 = vadd.f32 %v272, %v312
        %314 = vmatmul.f32.gmra.mxu0 %v281
        %v315 = vpop.f32.mrf.mxu0
        %v316 = vadd.f32 %v272, %v315
        %317 = vmatmul.f32.gmra.mxu0 %v284
        %v318 = vpop.f32.mrf.mxu0
        %v319 = vadd.f32 %v272, %v318
        %320 = vdwg.mxu0
        %vm321 = vcmask 130048
        %v322 = vsel %vm321, %v310, -inf
        %323 = vmax.xlane.f32.xlu0 %v322
        %v324 = vpop.xlane.xlu0 %323
        %v325 = vsel %vm321, %v313, -inf
        %326 = vmax.xlane.f32.xlu0 %v325
        %v327 = vpop.xlane.xlu0 %326
        %v328 = vsel %vm321, %v316, -inf
        %329 = vmax.xlane.f32.xlu0 %v328
        %v330 = vpop.xlane.xlu0 %329
        %v331 = vsel %vm321, %v319, -inf
        %332 = vmax.xlane.f32.xlu0 %v331
        %v333 = vpop.xlane.xlu0 %332
        %v334 = vsub.f32 %v310, %v324
        %v335 = vsub.f32 %v313, %v327
        %v336 = vsub.f32 %v316, %v330
        %v337 = vsub.f32 %v319, %v333
        %v338 = vmul.f32 %v334, 1.442695
        %v339 = vpow.pop %v338
        %v340 = vmul.f32 %v335, 1.442695
        %v341 = vpow.pop %v340
        %v342 = vmul.f32 %v336, 1.442695
        %v343 = vpow.pop %v342
        %v344 = vmul.f32 %v337, 1.442695
        %v345 = vpow.pop %v344
        %v346 = vsel %vm321, %v339, 0.0
        %347 = vadd.xlane.f32.xlu0 %v346
        %v348 = vpop.xlane.xlu0 %347
        %v349 = vsel %vm321, %v341, 0.0
        %350 = vadd.xlane.f32.xlu0 %v349
        %v351 = vpop.xlane.xlu0 %350
        %v352 = vsel %vm321, %v343, 0.0
        %353 = vadd.xlane.f32.xlu0 %v352
        %v354 = vpop.xlane.xlu0 %353
        %v355 = vsel %vm321, %v345, 0.0
        %356 = vadd.xlane.f32.xlu0 %v355
        %v357 = vpop.xlane.xlu0 %356
        %v358 = vrcp.pop %v348
        %v359 = vmul.f32 %v348, %v358
        %v360 = vsub.f32 1.0, %v359
        %v361 = vmul.f32 %v358, %v360
        %v362 = vadd.f32 %v358, %v361
        %vm363 = vweird.f32 %v348
        %vm364 = vweird.f32 %v358
        %vm365 = vmor %vm363, %vm364
        %v366 = vsel %vm365, %v358, %v362
        %v367 = vand.u32 2147483647, %v348
        %vm368 = vcmp.eq.f32.partialorder %v367, 8.507059e+37
        %v369 = vand.u32 %v348, 2147483648
        %v370 = vor.u32 1.1754944e-38, %v369
        %v371 = vsel %vm368, %v370, %v366
        %v372 = vrcp.pop %v351
        %v373 = vmul.f32 %v351, %v372
        %v374 = vsub.f32 1.0, %v373
        %v375 = vmul.f32 %v372, %v374
        %v376 = vadd.f32 %v372, %v375
        %vm377 = vweird.f32 %v351
        %vm378 = vweird.f32 %v372
        %vm379 = vmor %vm377, %vm378
        %v380 = vsel %vm379, %v372, %v376
        %v381 = vand.u32 2147483647, %v351
        %vm382 = vcmp.eq.f32.partialorder %v381, 8.507059e+37
        %v383 = vand.u32 %v351, 2147483648
        %v384 = vor.u32 1.1754944e-38, %v383
        %v385 = vsel %vm382, %v384, %v380
        %v386 = vrcp.pop %v354
        %v387 = vmul.f32 %v354, %v386
        %v388 = vsub.f32 1.0, %v387
        %v389 = vmul.f32 %v386, %v388
        %v390 = vadd.f32 %v386, %v389
        %vm391 = vweird.f32 %v354
        %vm392 = vweird.f32 %v386
        %vm393 = vmor %vm391, %vm392
        %v394 = vsel %vm393, %v386, %v390
        %v395 = vand.u32 2147483647, %v354
        %vm396 = vcmp.eq.f32.partialorder %v395, 8.507059e+37
        %v397 = vand.u32 %v354, 2147483648
        %v398 = vor.u32 1.1754944e-38, %v397
        %v399 = vsel %vm396, %v398, %v394
        %v400 = vrcp.pop %v357
        %v401 = vmul.f32 %v357, %v400
        %v402 = vsub.f32 1.0, %v401
        %v403 = vmul.f32 %v400, %v402
        %v404 = vadd.f32 %v400, %v403
        %vm405 = vweird.f32 %v357
        %vm406 = vweird.f32 %v400
        %vm407 = vmor %vm405, %vm406
        %v408 = vsel %vm407, %v400, %v404
        %v409 = vand.u32 2147483647, %v357
        %vm410 = vcmp.eq.f32.partialorder %v409, 8.507059e+37
        %v411 = vand.u32 %v357, 2147483648
        %v412 = vor.u32 1.1754944e-38, %v411
        %v413 = vsel %vm410, %v412, %v408
        %v414 = vmul.f32 %v339, %v371
        %v415 = vmul.f32 %v341, %v385
        %v416 = vmul.f32 %v343, %v399
        %v417 = vmul.f32 %v345, %v413
        %418 = vxpose.xlu0.b32.start [1/16] %v414, 128
        %419 = vxpose.xlu0.b32.cont [2/16] 0.0, 128
        %420 = vxpose.xlu0.b32.cont [3/16] 0.0, 128
        %421 = vxpose.xlu0.b32.cont [4/16] 0.0, 128
        %422 = vxpose.xlu0.b32.cont [5/16] 0.0, 128
        %423 = vxpose.xlu0.b32.cont [6/16] 0.0, 128
        %424 = vxpose.xlu0.b32.cont [7/16] 0.0, 128
        %425 = vxpose.xlu0.b32.cont [8/16] 0.0, 128
        %426 = vxpose.xlu0.b32.cont [9/16] 0.0, 128
        %427 = vxpose.xlu0.b32.cont [10/16] 0.0, 128
        %428 = vxpose.xlu0.b32.cont [11/16] 0.0, 128
        %429 = vxpose.xlu0.b32.cont [12/16] 0.0, 128
        %430 = vxpose.xlu0.b32.cont [13/16] 0.0, 128
        %431 = vxpose.xlu0.b32.cont [14/16] 0.0, 128
        %432 = vxpose.xlu0.b32.cont [15/16] 0.0, 128
        %433 = vxpose.xlu0.b32.end [16/16] 0.0, 128
        %v434 = vpop.trf.xlu0
        %v435 = vpop.trf.xlu0
        %v436 = vpop.trf.xlu0
        %v437 = vpop.trf.xlu0
        %v438 = vpop.trf.xlu0
        %v439 = vpop.trf.xlu0
        %v440 = vpop.trf.xlu0
        %v441 = vpop.trf.xlu0
        %v442 = vpop.trf.xlu0
        %v443 = vpop.trf.xlu0
        %v444 = vpop.trf.xlu0
        %v445 = vpop.trf.xlu0
        %v446 = vpop.trf.xlu0
        %v447 = vpop.trf.xlu0
        %v448 = vpop.trf.xlu0
        %v449 = vpop.trf.xlu0
        %vm450 = vcmask 64512
        %v452 = vsel %vm450, %v434, 0
        %v455 = vsel %vm450, %v435, 0
        %457 = vmatpush.msra.mxu0 0.0
        %458 = vmatpush.msra.mxu0 0.0
        %459 = vmatpush.msra.mxu0 0.0
        %460 = vmatpush.msra.mxu0 0.0
        %461 = vmatpush.msra.mxu0 0.0
        %462 = vmatpush.msra.mxu0 0.0
        %463 = vmatpush.msra.mxu0 0.0
        %464 = vmatpush.msra.mxu0 0.0
        %465 = vmatpush.msra.mxu0 0.0
        %466 = vmatpush.msra.mxu0 0.0
        %467 = vmatpush.msra.mxu0 0.0
        %468 = vmatpush.msra.mxu0 0.0
        %469 = vmatpush.msra.mxu0 0.0
        %470 = vmatpush.msra.mxu0 0.0
        %471 = vmatpush.msra.mxu0 0.0
        %472 = vmatpush.msra.mxu0 %v264
        %473 = vmatmul.f32.gmra.mxu0 %v452
        %v474 = vpop.f32.mrf.mxu0
        %v475 = vadd.f32 0.0, %v474
        %476 = vmatmul.f32.gmra.mxu0 %v455
        %v477 = vpop.f32.mrf.mxu0
        %v478 = vadd.f32 0.0, %v477
        %479 = vdwg.mxu0
        %480 = vxpose.xlu0.b32.start [1/16] %v415, 128
        %481 = vxpose.xlu0.b32.cont [2/16] 0.0, 128
        %482 = vxpose.xlu0.b32.cont [3/16] 0.0, 128
        %483 = vxpose.xlu0.b32.cont [4/16] 0.0, 128
        %484 = vxpose.xlu0.b32.cont [5/16] 0.0, 128
        %485 = vxpose.xlu0.b32.cont [6/16] 0.0, 128
        %486 = vxpose.xlu0.b32.cont [7/16] 0.0, 128
        %487 = vxpose.xlu0.b32.cont [8/16] 0.0, 128
        %488 = vxpose.xlu0.b32.cont [9/16] 0.0, 128
        %489 = vxpose.xlu0.b32.cont [10/16] 0.0, 128
        %490 = vxpose.xlu0.b32.cont [11/16] 0.0, 128
        %491 = vxpose.xlu0.b32.cont [12/16] 0.0, 128
        %492 = vxpose.xlu0.b32.cont [13/16] 0.0, 128
        %493 = vxpose.xlu0.b32.cont [14/16] 0.0, 128
        %494 = vxpose.xlu0.b32.cont [15/16] 0.0, 128
        %495 = vxpose.xlu0.b32.end [16/16] 0.0, 128
        %v496 = vpop.trf.xlu0
        %v497 = vpop.trf.xlu0
        %v498 = vpop.trf.xlu0
        %v499 = vpop.trf.xlu0
        %v500 = vpop.trf.xlu0
        %v501 = vpop.trf.xlu0
        %v502 = vpop.trf.xlu0
        %v503 = vpop.trf.xlu0
        %v504 = vpop.trf.xlu0
        %v505 = vpop.trf.xlu0
        %v506 = vpop.trf.xlu0
        %v507 = vpop.trf.xlu0
        %v508 = vpop.trf.xlu0
        %v509 = vpop.trf.xlu0
        %v510 = vpop.trf.xlu0
        %v511 = vpop.trf.xlu0
        %v513 = vsel %vm450, %v496, 0
        %v516 = vsel %vm450, %v497, 0
        %518 = vmatpush.msra.mxu0 0.0
        %519 = vmatpush.msra.mxu0 0.0
        %520 = vmatpush.msra.mxu0 0.0
        %521 = vmatpush.msra.mxu0 0.0
        %522 = vmatpush.msra.mxu0 0.0
        %523 = vmatpush.msra.mxu0 0.0
        %524 = vmatpush.msra.mxu0 0.0
        %525 = vmatpush.msra.mxu0 0.0
        %526 = vmatpush.msra.mxu0 0.0
        %527 = vmatpush.msra.mxu0 0.0
        %528 = vmatpush.msra.mxu0 0.0
        %529 = vmatpush.msra.mxu0 0.0
        %530 = vmatpush.msra.mxu0 0.0
        %531 = vmatpush.msra.mxu0 0.0
        %532 = vmatpush.msra.mxu0 0.0
        %533 = vmatpush.msra.mxu0 %v265
        %534 = vmatmul.f32.gmra.mxu0 %v513
        %v535 = vpop.f32.mrf.mxu0
        %v536 = vadd.f32 0.0, %v535
        %537 = vmatmul.f32.gmra.mxu0 %v516
        %v538 = vpop.f32.mrf.mxu0
        %v539 = vadd.f32 0.0, %v538
        %540 = vdwg.mxu0
        %541 = vxpose.xlu0.b32.start [1/16] %v416, 128
        %542 = vxpose.xlu0.b32.cont [2/16] 0.0, 128
        %543 = vxpose.xlu0.b32.cont [3/16] 0.0, 128
        %544 = vxpose.xlu0.b32.cont [4/16] 0.0, 128
        %545 = vxpose.xlu0.b32.cont [5/16] 0.0, 128
        %546 = vxpose.xlu0.b32.cont [6/16] 0.0, 128
        %547 = vxpose.xlu0.b32.cont [7/16] 0.0, 128
        %548 = vxpose.xlu0.b32.cont [8/16] 0.0, 128
        %549 = vxpose.xlu0.b32.cont [9/16] 0.0, 128
        %550 = vxpose.xlu0.b32.cont [10/16] 0.0, 128
        %551 = vxpose.xlu0.b32.cont [11/16] 0.0, 128
        %552 = vxpose.xlu0.b32.cont [12/16] 0.0, 128
        %553 = vxpose.xlu0.b32.cont [13/16] 0.0, 128
        %554 = vxpose.xlu0.b32.cont [14/16] 0.0, 128
        %555 = vxpose.xlu0.b32.cont [15/16] 0.0, 128
        %556 = vxpose.xlu0.b32.end [16/16] 0.0, 128
        %v557 = vpop.trf.xlu0
        %v558 = vpop.trf.xlu0
        %v559 = vpop.trf.xlu0
        %v560 = vpop.trf.xlu0
        %v561 = vpop.trf.xlu0
        %v562 = vpop.trf.xlu0
        %v563 = vpop.trf.xlu0
        %v564 = vpop.trf.xlu0
        %v565 = vpop.trf.xlu0
        %v566 = vpop.trf.xlu0
        %v567 = vpop.trf.xlu0
        %v568 = vpop.trf.xlu0
        %v569 = vpop.trf.xlu0
        %v570 = vpop.trf.xlu0
        %v571 = vpop.trf.xlu0
        %v572 = vpop.trf.xlu0
        %v574 = vsel %vm450, %v557, 0
        %v577 = vsel %vm450, %v558, 0
        %579 = vmatpush.msra.mxu0 0.0
        %580 = vmatpush.msra.mxu0 0.0
        %581 = vmatpush.msra.mxu0 0.0
        %582 = vmatpush.msra.mxu0 0.0
        %583 = vmatpush.msra.mxu0 0.0
        %584 = vmatpush.msra.mxu0 0.0
        %585 = vmatpush.msra.mxu0 0.0
        %586 = vmatpush.msra.mxu0 0.0
        %587 = vmatpush.msra.mxu0 0.0
        %588 = vmatpush.msra.mxu0 0.0
        %589 = vmatpush.msra.mxu0 0.0
        %590 = vmatpush.msra.mxu0 0.0
        %591 = vmatpush.msra.mxu0 0.0
        %592 = vmatpush.msra.mxu0 0.0
        %593 = vmatpush.msra.mxu0 0.0
        %594 = vmatpush.msra.mxu0 %v266
        %595 = vmatmul.f32.gmra.mxu0 %v574
        %v596 = vpop.f32.mrf.mxu0
        %v597 = vadd.f32 0.0, %v596
        %598 = vmatmul.f32.gmra.mxu0 %v577
        %v599 = vpop.f32.mrf.mxu0
        %v600 = vadd.f32 0.0, %v599
        %601 = vdwg.mxu0
        %602 = vxpose.xlu0.b32.start [1/16] %v417, 128
        %603 = vxpose.xlu0.b32.cont [2/16] 0.0, 128
        %604 = vxpose.xlu0.b32.cont [3/16] 0.0, 128
        %605 = vxpose.xlu0.b32.cont [4/16] 0.0, 128
        %606 = vxpose.xlu0.b32.cont [5/16] 0.0, 128
        %607 = vxpose.xlu0.b32.cont [6/16] 0.0, 128
        %608 = vxpose.xlu0.b32.cont [7/16] 0.0, 128
        %609 = vxpose.xlu0.b32.cont [8/16] 0.0, 128
        %610 = vxpose.xlu0.b32.cont [9/16] 0.0, 128
        %611 = vxpose.xlu0.b32.cont [10/16] 0.0, 128
        %612 = vxpose.xlu0.b32.cont [11/16] 0.0, 128
        %613 = vxpose.xlu0.b32.cont [12/16] 0.0, 128
        %614 = vxpose.xlu0.b32.cont [13/16] 0.0, 128
        %615 = vxpose.xlu0.b32.cont [14/16] 0.0, 128
        %616 = vxpose.xlu0.b32.cont [15/16] 0.0, 128
        %617 = vxpose.xlu0.b32.end [16/16] 0.0, 128
        %v618 = vpop.trf.xlu0
        %v619 = vpop.trf.xlu0
        %v620 = vpop.trf.xlu0
        %v621 = vpop.trf.xlu0
        %v622 = vpop.trf.xlu0
        %v623 = vpop.trf.xlu0
        %v624 = vpop.trf.xlu0
        %v625 = vpop.trf.xlu0
        %v626 = vpop.trf.xlu0
        %v627 = vpop.trf.xlu0
        %v628 = vpop.trf.xlu0
        %v629 = vpop.trf.xlu0
        %v630 = vpop.trf.xlu0
        %v631 = vpop.trf.xlu0
        %v632 = vpop.trf.xlu0
        %v633 = vpop.trf.xlu0
        %v635 = vsel %vm450, %v618, 0
        %v638 = vsel %vm450, %v619, 0
        %640 = vmatpush.msra.mxu0 0.0
        %641 = vmatpush.msra.mxu0 0.0
        %642 = vmatpush.msra.mxu0 0.0
        %643 = vmatpush.msra.mxu0 0.0
        %644 = vmatpush.msra.mxu0 0.0
        %645 = vmatpush.msra.mxu0 0.0
        %646 = vmatpush.msra.mxu0 0.0
        %647 = vmatpush.msra.mxu0 0.0
        %648 = vmatpush.msra.mxu0 0.0
        %649 = vmatpush.msra.mxu0 0.0
        %650 = vmatpush.msra.mxu0 0.0
        %651 = vmatpush.msra.mxu0 0.0
        %652 = vmatpush.msra.mxu0 0.0
        %653 = vmatpush.msra.mxu0 0.0
        %654 = vmatpush.msra.mxu0 0.0
        %655 = vmatpush.msra.mxu0 %v267
        %656 = vmatmul.f32.gmra.mxu0 %v635
        %v657 = vpop.f32.mrf.mxu0
        %v658 = vadd.f32 0.0, %v657
        %659 = vmatmul.f32.gmra.mxu0 %v638
        %v660 = vpop.f32.mrf.mxu0
        %v661 = vadd.f32 0.0, %v660
        %662 = vdwg.mxu0
        %v663 = vsel %vm321, %v414, 0.0
        %v664 = vrot.slane %v663, 4
        %v665 = vadd.f32 %v663, %v664
        %v666 = vrot.slane %v665, 2
        %v667 = vadd.f32 %v665, %v666
        %v668 = vrot.slane %v667, 1
        %v669 = vadd.f32 %v667, %v668
        %v670 = vsel %vm321, %v415, 0.0
        %v671 = vrot.slane %v670, 4
        %v672 = vadd.f32 %v670, %v671
        %v673 = vrot.slane %v672, 2
        %v674 = vadd.f32 %v672, %v673
        %v675 = vrot.slane %v674, 1
        %v676 = vadd.f32 %v674, %v675
        %v677 = vsel %vm321, %v416, 0.0
        %v678 = vrot.slane %v677, 4
        %v679 = vadd.f32 %v677, %v678
        %v680 = vrot.slane %v679, 2
        %v681 = vadd.f32 %v679, %v680
        %v682 = vrot.slane %v681, 1
        %v683 = vadd.f32 %v681, %v682
        %v684 = vsel %vm321, %v417, 0.0
        %v685 = vrot.slane %v684, 4
        %v686 = vadd.f32 %v684, %v685
        %v687 = vrot.slane %v686, 2
        %v688 = vadd.f32 %v686, %v687
        %v689 = vrot.slane %v688, 1
        %v690 = vadd.f32 %v688, %v689
        %v691 = vlaneseq
        %v692 = vshrl.u32 %v691, 7
        %694 = vset.pattern.permute.xlu0 %v692
        %695 = vperm.xlu0 %694, %v669
        %v696 = vpop.permute.xlu0 %695
        %v697 = vlaneseq
        %v698 = vshrl.u32 %v697, 7
        %v699 = vadd.s32 %v698, 8
        %700 = vset.pattern.permute.xlu0 %v699
        %701 = vperm.xlu0 %700, %v669
        %v702 = vpop.permute.xlu0 %701
        %v703 = vlaneseq
        %v704 = vshrl.u32 %v703, 7
        %706 = vset.pattern.permute.xlu0 %v704
        %707 = vperm.xlu0 %706, %v676
        %v708 = vpop.permute.xlu0 %707
        %v709 = vlaneseq
        %v710 = vshrl.u32 %v709, 7
        %v711 = vadd.s32 %v710, 8
        %712 = vset.pattern.permute.xlu0 %v711
        %713 = vperm.xlu0 %712, %v676
        %v714 = vpop.permute.xlu0 %713
        %v715 = vlaneseq
        %v716 = vshrl.u32 %v715, 7
        %718 = vset.pattern.permute.xlu0 %v716
        %719 = vperm.xlu0 %718, %v683
        %v720 = vpop.permute.xlu0 %719
        %v721 = vlaneseq
        %v722 = vshrl.u32 %v721, 7
        %v723 = vadd.s32 %v722, 8
        %724 = vset.pattern.permute.xlu0 %v723
        %725 = vperm.xlu0 %724, %v683
        %v726 = vpop.permute.xlu0 %725
        %v727 = vlaneseq
        %v728 = vshrl.u32 %v727, 7
        %730 = vset.pattern.permute.xlu0 %v728
        %731 = vperm.xlu0 %730, %v690
        %v732 = vpop.permute.xlu0 %731
        %v733 = vlaneseq
        %v734 = vshrl.u32 %v733, 7
        %v735 = vadd.s32 %v734, 8
        %736 = vset.pattern.permute.xlu0 %v735
        %737 = vperm.xlu0 %736, %v690
        %v738 = vpop.permute.xlu0 %737
        %v739 = vld [vmem:[%s3] sm:$0xff]
        %v740 = vld [vmem:[%s3 + $0x8] sm:$0xff]
        %v741 = vmul.f32 %v696, %v739
        %v742 = vmul.f32 %v702, %v740
        %v743 = vmul.f32 %v708, %v739
        %v744 = vmul.f32 %v714, %v740
        %v745 = vmul.f32 %v720, %v739
        %v746 = vmul.f32 %v726, %v740
        %v747 = vmul.f32 %v732, %v739
        %v748 = vmul.f32 %v738, %v740
        %v749 = vsub.f32 %v475, %v741
        %v750 = vsub.f32 %v478, %v742
        %v751 = vsub.f32 %v536, %v743
        %v752 = vsub.f32 %v539, %v744
        %v753 = vsub.f32 %v597, %v745
        %v754 = vsub.f32 %v600, %v746
        %v755 = vsub.f32 %v658, %v747
        %v756 = vsub.f32 %v661, %v748
        %v757 = vmul.f32 %v749, %v749
        %v758 = vmul.f32 %v750, %v750
        %v759 = vmul.f32 %v751, %v751
        %v760 = vmul.f32 %v752, %v752
        %v761 = vmul.f32 %v753, %v753
        %v762 = vmul.f32 %v754, %v754
        %v763 = vmul.f32 %v755, %v755
        %v764 = vmul.f32 %v756, %v756
        %v765 = vsel %vm207, %v757, 0.0
        %766 = vadd.xlane.f32.xlu0 %v765
        %v767 = vpop.xlane.xlu0 %766
        %v768 = vsel %vm207, %v758, 0.0
        %769 = vadd.xlane.f32.xlu0 %v768
        %v770 = vpop.xlane.xlu0 %769
        %v771 = vsel %vm207, %v759, 0.0
        %772 = vadd.xlane.f32.xlu0 %v771
        %v773 = vpop.xlane.xlu0 %772
        %v774 = vsel %vm207, %v760, 0.0
        %775 = vadd.xlane.f32.xlu0 %v774
        %v776 = vpop.xlane.xlu0 %775
        %v777 = vsel %vm207, %v761, 0.0
        %778 = vadd.xlane.f32.xlu0 %v777
        %v779 = vpop.xlane.xlu0 %778
        %v780 = vsel %vm207, %v762, 0.0
        %781 = vadd.xlane.f32.xlu0 %v780
        %v782 = vpop.xlane.xlu0 %781
        %v783 = vsel %vm207, %v763, 0.0
        %784 = vadd.xlane.f32.xlu0 %v783
        %v785 = vpop.xlane.xlu0 %784
        %v786 = vsel %vm207, %v764, 0.0
        %787 = vadd.xlane.f32.xlu0 %v786
        %v788 = vpop.xlane.xlu0 %787
        %v789 = vmax.f32 %v767, 1e-24
        %v790 = vmax.f32 %v770, 1e-24
        %v791 = vmax.f32 %v773, 1e-24
        %v792 = vmax.f32 %v776, 1e-24
        %v793 = vmax.f32 %v779, 1e-24
        %v794 = vmax.f32 %v782, 1e-24
        %v795 = vmax.f32 %v785, 1e-24
        %v796 = vmax.f32 %v788, 1e-24
        %v797 = vrsqrt.pop %v789
        %v798 = vmul.f32 %v797, %v789
        %v799 = vmul.f32 %v798, %v797
        %v800 = vmul.f32 0.5, %v799
        %v801 = vsub.f32 1.5, %v800
        %v802 = vmul.f32 %v797, %v801
        %vm803 = vweird.f32 %v789
        %vm804 = vweird.f32 %v797
        %vm805 = vmor %vm803, %vm804
        %v806 = vsel %vm805, %v797, %v802
        %v807 = vrsqrt.pop %v790
        %v808 = vmul.f32 %v807, %v790
        %v809 = vmul.f32 %v808, %v807
        %v810 = vmul.f32 0.5, %v809
        %v811 = vsub.f32 1.5, %v810
        %v812 = vmul.f32 %v807, %v811
        %vm813 = vweird.f32 %v790
        %vm814 = vweird.f32 %v807
        %vm815 = vmor %vm813, %vm814
        %v816 = vsel %vm815, %v807, %v812
        %v817 = vrsqrt.pop %v791
        %v818 = vmul.f32 %v817, %v791
        %v819 = vmul.f32 %v818, %v817
        %v820 = vmul.f32 0.5, %v819
        %v821 = vsub.f32 1.5, %v820
        %v822 = vmul.f32 %v817, %v821
        %vm823 = vweird.f32 %v791
        %vm824 = vweird.f32 %v817
        %vm825 = vmor %vm823, %vm824
        %v826 = vsel %vm825, %v817, %v822
        %v827 = vrsqrt.pop %v792
        %v828 = vmul.f32 %v827, %v792
        %v829 = vmul.f32 %v828, %v827
        %v830 = vmul.f32 0.5, %v829
        %v831 = vsub.f32 1.5, %v830
        %v832 = vmul.f32 %v827, %v831
        %vm833 = vweird.f32 %v792
        %vm834 = vweird.f32 %v827
        %vm835 = vmor %vm833, %vm834
        %v836 = vsel %vm835, %v827, %v832
        %v837 = vrsqrt.pop %v793
        %v838 = vmul.f32 %v837, %v793
        %v839 = vmul.f32 %v838, %v837
        %v840 = vmul.f32 0.5, %v839
        %v841 = vsub.f32 1.5, %v840
        %v842 = vmul.f32 %v837, %v841
        %vm843 = vweird.f32 %v793
        %vm844 = vweird.f32 %v837
        %vm845 = vmor %vm843, %vm844
        %v846 = vsel %vm845, %v837, %v842
        %v847 = vrsqrt.pop %v794
        %v848 = vmul.f32 %v847, %v794
        %v849 = vmul.f32 %v848, %v847
        %v850 = vmul.f32 0.5, %v849
        %v851 = vsub.f32 1.5, %v850
        %v852 = vmul.f32 %v847, %v851
        %vm853 = vweird.f32 %v794
        %vm854 = vweird.f32 %v847
        %vm855 = vmor %vm853, %vm854
        %v856 = vsel %vm855, %v847, %v852
        %v857 = vrsqrt.pop %v795
        %v858 = vmul.f32 %v857, %v795
        %v859 = vmul.f32 %v858, %v857
        %v860 = vmul.f32 0.5, %v859
        %v861 = vsub.f32 1.5, %v860
        %v862 = vmul.f32 %v857, %v861
        %vm863 = vweird.f32 %v795
        %vm864 = vweird.f32 %v857
        %vm865 = vmor %vm863, %vm864
        %v866 = vsel %vm865, %v857, %v862
        %v867 = vrsqrt.pop %v796
        %v868 = vmul.f32 %v867, %v796
        %v869 = vmul.f32 %v868, %v867
        %v870 = vmul.f32 0.5, %v869
        %v871 = vsub.f32 1.5, %v870
        %v872 = vmul.f32 %v867, %v871
        %vm873 = vweird.f32 %v796
        %vm874 = vweird.f32 %v867
        %vm875 = vmor %vm873, %vm874
        %v876 = vsel %vm875, %v867, %v872
        %v877 = vmul.f32 %v749, %v806
        %v878 = vmul.f32 %v750, %v816
        %v879 = vmul.f32 %v751, %v826
        %v880 = vmul.f32 %v752, %v836
        %v881 = vmul.f32 %v753, %v846
        %v882 = vmul.f32 %v754, %v856
        %v883 = vmul.f32 %v755, %v866
        %v884 = vmul.f32 %v756, %v876
        %v885 = vrot.slane %v881, 4
        %vm886 = vcmask 1047556
        %v887 = vsel %vm886, %v885, %v877
        %v888 = vrot.slane %v877, 4
        %v889 = vsel %vm886, %v881, %v888
        %v891 = vunpack.c.l.s4 1983009808
        %v892 = vunpack.c.0.s8 %v891
        %v893 = vperm.slane %v887, %v892
        %v895 = vunpack.c.l.s4 1983009808
        %v896 = vunpack.c.0.s8 %v895
        %v897 = vperm.slane %v889, %v896
        %v898 = vrot.slane %v883, 4
        %v899 = vsel %vm886, %v898, %v879
        %v900 = vrot.slane %v879, 4
        %v901 = vsel %vm886, %v883, %v900
        %v903 = vunpack.c.l.s4 1983009808
        %v904 = vunpack.c.0.s8 %v903
        %v905 = vperm.slane %v899, %v904
        %v907 = vunpack.c.l.s4 1983009808
        %v908 = vunpack.c.0.s8 %v907
        %v909 = vperm.slane %v901, %v908
        %v910 = vrot.slane %v905, 4
        %v911 = vsel %vm886, %v910, %v893
        %v912 = vrot.slane %v893, 4
        %v913 = vsel %vm886, %v905, %v912
        %v915 = vunpack.c.l.s4 1934713408
        %v916 = vunpack.c.0.s8 %v915
        %v917 = vperm.slane %v911, %v916
        %v919 = vunpack.c.l.s4 1934713408
        %v920 = vunpack.c.0.s8 %v919
        %v921 = vperm.slane %v913, %v920
        %v922 = vrot.slane %v909, 4
        %v923 = vsel %vm886, %v922, %v897
        %v924 = vrot.slane %v897, 4
        %v925 = vsel %vm886, %v909, %v924
        %v927 = vunpack.c.l.s4 1934713408
        %v928 = vunpack.c.0.s8 %v927
        %v929 = vperm.slane %v923, %v928
        %v931 = vunpack.c.l.s4 1934713408
        %v932 = vunpack.c.0.s8 %v931
        %v933 = vperm.slane %v925, %v932
        %v934 = vrot.slane %v917, 4
        %v935 = vsel %vm886, 0.0, %v934
        %v936 = vrot.slane %v921, 4
        %v937 = vsel %vm886, 0.0, %v936
        %v938 = vrot.slane %v929, 4
        %v939 = vsel %vm886, 0.0, %v938
        %v940 = vrot.slane %v933, 4
        %v941 = vsel %vm886, 0.0, %v940
        %v942 = vrot.slane %v882, 4
        %v943 = vsel %vm886, %v942, %v878
        %v944 = vrot.slane %v878, 4
        %v945 = vsel %vm886, %v882, %v944
        %v947 = vunpack.c.l.s4 1983009808
        %v948 = vunpack.c.0.s8 %v947
        %v949 = vperm.slane %v943, %v948
        %v951 = vunpack.c.l.s4 1983009808
        %v952 = vunpack.c.0.s8 %v951
        %v953 = vperm.slane %v945, %v952
        %v954 = vrot.slane %v884, 4
        %v955 = vsel %vm886, %v954, %v880
        %v956 = vrot.slane %v880, 4
        %v957 = vsel %vm886, %v884, %v956
        %v959 = vunpack.c.l.s4 1983009808
        %v960 = vunpack.c.0.s8 %v959
        %v961 = vperm.slane %v955, %v960
        %v963 = vunpack.c.l.s4 1983009808
        %v964 = vunpack.c.0.s8 %v963
        %v965 = vperm.slane %v957, %v964
        %v966 = vrot.slane %v961, 4
        %v967 = vsel %vm886, %v966, %v949
        %v968 = vrot.slane %v949, 4
        %v969 = vsel %vm886, %v961, %v968
        %v971 = vunpack.c.l.s4 1934713408
        %v972 = vunpack.c.0.s8 %v971
        %v973 = vperm.slane %v967, %v972
        %v975 = vunpack.c.l.s4 1934713408
        %v976 = vunpack.c.0.s8 %v975
        %v977 = vperm.slane %v969, %v976
        %v978 = vrot.slane %v965, 4
        %v979 = vsel %vm886, %v978, %v953
        %v980 = vrot.slane %v953, 4
        %v981 = vsel %vm886, %v965, %v980
        %v983 = vunpack.c.l.s4 1934713408
        %v984 = vunpack.c.0.s8 %v983
        %v985 = vperm.slane %v979, %v984
        %v987 = vunpack.c.l.s4 1934713408
        %v988 = vunpack.c.0.s8 %v987
        %v989 = vperm.slane %v981, %v988
        %v990 = vrot.slane %v973, 4
        %v991 = vsel %vm886, 0.0, %v990
        %v992 = vrot.slane %v977, 4
        %v993 = vsel %vm886, 0.0, %v992
        %v994 = vrot.slane %v985, 4
        %v995 = vsel %vm886, 0.0, %v994
        %v996 = vrot.slane %v989, 4
        %v997 = vsel %vm886, 0.0, %v996
        %999 = vrot.lane.b32.xlu0 %v935, 32
        %v1000 = vpop.permute.xlu0 %999
        %1003 = vrot.lane.b32.xlu0 %v921, 64
        %v1004 = vpop.permute.xlu0 %1003
        %1007 = vrot.lane.b32.xlu0 %v937, 96
        %v1008 = vpop.permute.xlu0 %1007
        %1011 = vrot.lane.b32.xlu0 %v939, 32
        %v1012 = vpop.permute.xlu0 %1011
        %1015 = vrot.lane.b32.xlu0 %v933, 64
        %v1016 = vpop.permute.xlu0 %1015
        %1019 = vrot.lane.b32.xlu0 %v941, 96
        %v1020 = vpop.permute.xlu0 %1019
        %1023 = vrot.lane.b32.xlu0 %v991, 32
        %v1024 = vpop.permute.xlu0 %1023
        %1027 = vrot.lane.b32.xlu0 %v977, 64
        %v1028 = vpop.permute.xlu0 %1027
        %1031 = vrot.lane.b32.xlu0 %v993, 96
        %v1032 = vpop.permute.xlu0 %1031
        %1035 = vrot.lane.b32.xlu0 %v995, 32
        %v1036 = vpop.permute.xlu0 %1035
        %1039 = vrot.lane.b32.xlu0 %v989, 64
        %v1040 = vpop.permute.xlu0 %1039
        %1043 = vrot.lane.b32.xlu0 %v997, 96
        %v1044 = vpop.permute.xlu0 %1043
        %v1046 = vsel %vm207, %v917, %v1000
        %vm1047 = vcmask 523264
        %v1048 = vsel %vm1047, %v1046, %v1004
        %vm1049 = vcmask 785408
        %v1050 = vsel %vm1049, %v1048, %v1008
        %v1051 = vsel %vm207, %v929, %v1012
        %v1052 = vsel %vm1047, %v1051, %v1016
        %v1053 = vsel %vm1049, %v1052, %v1020
        %v1054 = vsel %vm207, %v973, %v1024
        %v1055 = vsel %vm1047, %v1054, %v1028
        %v1056 = vsel %vm1049, %v1055, %v1032
        %v1057 = vsel %vm207, %v985, %v1036
        %v1058 = vsel %vm1047, %v1057, %v1040
        %v1059 = vsel %vm1049, %v1058, %v1044
        %v1060 = vmul.f32 %v1050, %v1050
        %v1061 = vmul.f32 %v1053, %v1053
        %v1062 = vmul.f32 %v1056, %v1056
        %v1063 = vmul.f32 %v1059, %v1059
        %vm1064 = vcmask 1043456
        %v1065 = vsel %vm1064, %v1060, 0.0
        %v1066 = vsel %vm1064, %v1061, 0.0
        %v1067 = vadd.f32 %v1065, %v1066
        %v1068 = vsel %vm1064, %v1062, 0.0
        %v1069 = vadd.f32 %v1067, %v1068
        %v1070 = vsel %vm1064, %v1063, 0.0
        %v1071 = vadd.f32 %v1069, %v1070
        %1072 = vadd.xlane.f32.xlu0 %v1071
        %v1073 = vpop.xlane.xlu0 %1072
        %v1074 = vmax.f32 %v1073, 1e-24
        %v1075 = vrsqrt.pop %v1074
        %v1076 = vmul.f32 %v1075, %v1074
        %v1077 = vmul.f32 %v1076, %v1075
        %v1078 = vmul.f32 0.5, %v1077
        %v1079 = vsub.f32 1.5, %v1078
        %v1080 = vmul.f32 %v1075, %v1079
        %vm1081 = vweird.f32 %v1074
        %vm1082 = vweird.f32 %v1075
        %vm1083 = vmor %vm1081, %vm1082
        %v1084 = vsel %vm1083, %v1075, %v1080
        %v1085 = vmul.f32 %v1050, %v1084
        %v1086 = vmul.f32 %v1053, %v1084
        %v1087 = vmul.f32 %v1056, %v1084
        %v1088 = vmul.f32 %v1059, %v1084
        %v1093 = vrot.slane %v1086, 7
        %v1094 = vrot.slane %v1087, 6
        %v1095 = vrot.slane %v1088, 5
        %vm1096 = vcmask 1040384
        %v1097 = vsel %vm1096, %v1085, %v1093
        %vm1098 = vcmask 1042434
        %v1099 = vsel %vm1098, %v1094, %v1095
        %vm1100 = vcmask 1041408
        %v1101 = vsel %vm1100, %v1097, %v1099
        %vm1102 = vcmask 1041409
        %v1103 = vsel %vm1102, %v1085, %v1093
        %vm1104 = vcmask 1043459
        %v1105 = vsel %vm1104, %v1094, %v1095
        %vm1106 = vcmask 1042433
        %v1107 = vsel %vm1106, %v1103, %v1105
        %v1108 = vrot.slane %v1107, 1
        %v1109 = vsel %vm1098, %v1085, %v1093
        %vm1110 = vcmask 1044484
        %v1111 = vsel %vm1110, %v1094, %v1095
        %vm1112 = vcmask 1043458
        %v1113 = vsel %vm1112, %v1109, %v1111
        %v1114 = vrot.slane %v1113, 2
        %v1115 = vsel %vm1104, %v1085, %v1093
        %vm1116 = vcmask 1045509
        %v1117 = vsel %vm1116, %v1094, %v1095
        %vm1118 = vcmask 1044483
        %v1119 = vsel %vm1118, %v1115, %v1117
        %v1120 = vrot.slane %v1119, 3
        %v1125 = vlaneseq
        %vm1126 = vcmp.ge.s32.totalorder %v1125, 0
        %vm1127 = vcmp.lt.s32.totalorder %v1125, 512
        %vm1128 = vmand %vm1126, %vm1127
        %1129 = vst.msk [vmem:[%s191] sm:$0xf] %vm1128, %v1101
        %1130 = vst.msk [vmem:[%s191 + $0x4] sm:$0xf] %vm1128, %v1108
        %1131 = vst.msk [vmem:[%s191 + $0x8] sm:$0xf] %vm1128, %v1114
        %1132 = vst.msk [vmem:[%s191 + $0xc] sm:$0xf] %vm1128, %v1120
        %s1133 = sand.u32 %s115, 1
        %s1134 = scalar_lea.sflag [#allocation3], %s1133
        %s1135 = sand.u32 %s115, 1
        %s1136 = smul.addr %s1135, 16
        %s1137 = scalar_lea.vmem [#allocation2], %s1136
        // Predicated region
        $region37: #{tpu_custom_call.1} parent=35 // pred_check
          %p1138 = pneg %p125
        $region38: #{tpu_custom_call.1} parent=35 // pred_check_branch
          %1140 = sbr.rel (%p1138) target = $region40
        $region39: #{tpu_custom_call.1} parent=35 // pred_region
          %s1141 = smul.u32 4, %s18
          %1143 = vsyncadd %s1134, 0
          %s1144 = smul.addr %s1141, 4
          %s1145 = scalar_lea.hbm %s4, %s1144
          %s1146 = sshll.u32 %s1137, 4
          %s1147 = int_to_ptr.vmem [resolvable:$true] %s1146
          %s1148 = sshll.u32 %s1145, 4
          %s1149 = int_to_ptr.hbm [resolvable:$true] %s1148
          %1154 = dma.vmem_to_hbm [thread:$0]  %s1147, 256, %s1149, %s1134, 64, 64, 4
        $region40: #{tpu_custom_call.1} parent=35 // pred_fallthru
          _
      $region36: #{tpu_custom_call.1} parent=5 // pred_fallthru
        _
      %p1155 = scmp.le.s32.totalorder 2, %s13
      // Predicated region
      $region41: #{tpu_custom_call.1} parent=5 // pred_check
        %p1156 = pneg %p1155
      $region42: #{tpu_custom_call.1} parent=5 // pred_check_branch
        %1158 = sbr.rel (%p1156) target = $region44
      $region43: #{tpu_custom_call.1} parent=5 // pred_region
        %s1159 = ssub.s32 %s13, 2
        // Predicated region
        $region45: #{tpu_custom_call.1} parent=43 // pred_check
          %p1160 = pneg %p131
        $region46: #{tpu_custom_call.1} parent=43 // pred_check_branch
          %1162 = sbr.rel (%p1160) target = $region48
        $region47: #{tpu_custom_call.1} parent=43 // pred_region
          %s1163 = sand.u32 %s116, 1
          %s1164 = scalar_lea.sflag [#allocation3], %s1163
          %s1165 = sand.u32 %s116, 1
          %s1166 = smul.addr %s1165, 16
          %s1167 = scalar_lea.vmem [#allocation2], %s1166
          %1169 = dma.done %s1164, 256
        $region48: #{tpu_custom_call.1} parent=43 // pred_fallthru
          _
      $region44: #{tpu_custom_call.1} parent=5 // pred_fallthru
        _
    $region6: #{tpu_custom_call.1} parent=1 // loop_footer
      %s17 = sadd.s32 1, %s13
    $region7: #{tpu_custom_call.1} parent=1 // loop_footer_branch
      %12 = sbr.rel target = $region3
    $region8: #{tpu_custom_call.1} parent=1 // loop_exit
      _
    %1170 = vsyncpa [#allocation3], 1
    %s1171 = scalar_lea.sflag [#allocation3], 1
    %1172 = vsyncpa %s1171, 1

</llo_original>
